<compile_context>
chip_gen: v5e
topology: v5e:2x2
jax: 0.10.0
libtpu: 0.0.40
codegen_flags: <defaults>
</compile_context>

<pallas_src>
import jax
import jax.numpy as jnp
from jax import lax
from jax.experimental import pallas as pl
from jax.experimental.pallas import tpu as pltpu

STATE_DIM = 4
ACTION_DIM = 2
HIDDEN_DIM = 32
FUSED_DIM = 2 * HIDDEN_DIM        # actor half | critic half
OUT_PAD = 8                       # rows: [mean0, mean1, value, 0, 0, 0, 0, 0]
MISC_COLS = 16
LN_EPS = 1e-5
LANE = 128


def _ln_relu(h, amat, gamma, beta):
    """Per-head LayerNorm + ReLU in [feature, batch] layout.

    Statistics go through the MXU: `amat` is a block-diagonal averaging matrix,
    so mu = A @ h and ms = A @ (h*h) broadcast each head's mean / E[x^2] to every
    row of that head. gamma is folded into the rsqrt scale; LN stays in f32.
    """
    mu = jnp.dot(amat, h, preferred_element_type=jnp.float32)
    ms = jnp.dot(amat, h * h, preferred_element_type=jnp.float32)
    inv = lax.rsqrt(ms - mu * mu + LN_EPS)
    scale = inv * gamma                       # (64, B)
    return jnp.maximum(h * scale + (beta - mu * scale), 0.0)


def actor_critic_kernel(x_ref, w1_ref, w2_ref, w3_ref, amat_ref, misc_ref, out_ref):
    x = x_ref[...]                    # (STATE_DIM, Bb) lane-dense input block
    amat = amat_ref[...]              # (64, 64) block-averaging matrix
    misc = misc_ref[...]              # (64, 16) packed constants (column vectors)

    b1, g1, be1 = misc[:, 0:1], misc[:, 1:2], misc[:, 2:3]
    b2, g2, be2 = misc[:, 3:4], misc[:, 4:5], misc[:, 5:6]
    b3 = misc[:OUT_PAD, 6:7]
    o_scale = misc[:OUT_PAD, 7:8]     # [25, pi, 0, ...]
    o_lin = misc[:OUT_PAD, 8:9]       # [0,  0,  1, ...]
    o_off = misc[:OUT_PAD, 9:10]      # [25, 0,  0, ...]

    # layer 1: both heads in one matmul (M=64, K=4, N=batch)
    h = jnp.dot(w1_ref[...], x, preferred_element_type=jnp.float32) + b1
    h = _ln_relu(h, amat, g1, be1)
    # dropout (eval mode) = identity

    # layer 2: block-diagonal fused (M=64, K=64, N=batch)
    h = jnp.dot(w2_ref[...], h, preferred_element_type=jnp.float32) + b2
    h = _ln_relu(h, amat, g2, be2)
    # dropout (eval mode) = identity

    # layer 3: fused output head (M=8, K=64, N=batch)
    z = jnp.dot(w3_ref[...], h, preferred_element_type=jnp.float32) + b3
    # row0: tanh*25+25 ; row1: tanh*pi ; row2: passthrough (value) ; pads stay 0
    out_ref[...] = jnp.tanh(z) * o_scale + z * o_lin + o_off


def pack_params(params):
    """Pack PyTorch-style per-layer params into transposed fused slabs + one misc slab."""
    (aw1, ab1, ag1, abe1, aw2, ab2, ag2, abe2, aw3, ab3,
     cw1, cb1, cg1, cbe1, cw2, cb2, cg2, cbe2, cw3, cb3) = params
    H, F = HIDDEN_DIM, FUSED_DIM

    # Weights transposed to [out_features, in_features] for the feature-major layout.
    w1t = jnp.concatenate([aw1, cw1], axis=1).T                       # (64, 4)

    w2 = jnp.zeros((F, F), jnp.float32)
    w2 = w2.at[:H, :H].set(aw2).at[H:, H:].set(cw2)
    w2t = w2.T                                                        # (64, 64)

    w3 = jnp.zeros((F, OUT_PAD), jnp.float32)
    w3 = w3.at[:H, :ACTION_DIM].set(aw3)
    w3 = w3.at[H:, ACTION_DIM:ACTION_DIM + 1].set(cw3)
    w3t = w3.T                                                        # (8, 64)

    # Block-diagonal averaging matrix: MXU-side per-head LayerNorm statistics.
    amat = jnp.kron(jnp.eye(2, dtype=jnp.float32),
                    jnp.full((H, H), 1.0 / H, jnp.float32))           # (64, 64)

    def col64(a, c):
        return jnp.concatenate([a.reshape(-1), c.reshape(-1)], axis=0)

    b1, g1, be1 = col64(ab1, cb1), col64(ag1, cg1), col64(abe1, cbe1)
    b2, g2, be2 = col64(ab2, cb2), col64(ag2, cg2), col64(abe2, cbe2)

    b3 = jnp.zeros((F,), jnp.float32)
    b3 = b3.at[:ACTION_DIM].set(ab3.reshape(-1))
    b3 = b3.at[ACTION_DIM].set(cb3.reshape(-1)[0])

    o_scale = jnp.zeros((F,), jnp.float32).at[0].set(25.0).at[1].set(jnp.pi)
    o_lin = jnp.zeros((F,), jnp.float32).at[2].set(1.0)
    o_off = jnp.zeros((F,), jnp.float32).at[0].set(25.0)

    pad = jnp.zeros((F,), jnp.float32)
    cols = [b1, g1, be1, b2, g2, be2, b3, o_scale, o_lin, o_off]
    cols += [pad] * (MISC_COLS - len(cols))
    misc = jnp.stack(cols, axis=1)                                    # (64, 16)
    return w1t, w2t, w3t, amat, misc


def actor_critic_forward(state, packed, *, batch_block=1024):
    """Returns (action_mean_scaled [B, 2], value [B, 1])."""
    w1t, w2t, w3t, amat, misc = packed
    B = state.shape[0]
    xt = jnp.transpose(state).astype(jnp.float32)        # (4, B) lane-dense layout

    vmem = pl.BlockSpec(memory_space=pltpu.MemorySpace.VMEM)

    if B <= batch_block:
        # Small batch: single invocation, everything VMEM-resident, no grid overhead.
        bp = max(LANE, pl.cdiv(B, LANE) * LANE)
        if bp != B:
            xt = jnp.pad(xt, ((0, 0), (0, bp - B)))
        out_t = pl.pallas_call(
            actor_critic_kernel,
            out_shape=jax.ShapeDtypeStruct((OUT_PAD, bp), jnp.float32),
            in_specs=[vmem] * 6,
            out_specs=vmem,
        )(xt, w1t, w2t, w3t, amat, misc)
    else:
        # Large batch: zero-pad to a multiple of batch_block and run a cdiv grid
        # (keeps per-step VMEM bounded on v7x, restores DMA/compute overlap).
        nblk = pl.cdiv(B, batch_block)
        bp = nblk * batch_block
        if bp != B:
            xt = jnp.pad(xt, ((0, 0), (0, bp - B)))
        out_t = pl.pallas_call(
            actor_critic_kernel,
            out_shape=jax.ShapeDtypeStruct((OUT_PAD, bp), jnp.float32),
            grid=(nblk,),
            in_specs=[
                pl.BlockSpec((STATE_DIM, batch_block), lambda i: (0, i)),
                pl.BlockSpec(w1t.shape, lambda i: (0, 0)),   # constant index_map:
                pl.BlockSpec(w2t.shape, lambda i: (0, 0)),   # slabs stay resident
                pl.BlockSpec(w3t.shape, lambda i: (0, 0)),   # across grid steps
                pl.BlockSpec(amat.shape, lambda i: (0, 0)),
                pl.BlockSpec(misc.shape, lambda i: (0, 0)),
            ],
            out_specs=pl.BlockSpec((OUT_PAD, batch_block), lambda i: (0, i)),
            compiler_params=pltpu.CompilerParams(
                dimension_semantics=("parallel",)),
        )(xt, w1t, w2t, w3t, amat, misc)

    mean = out_t[:ACTION_DIM, :B].T                      # (B, 2)
    value = out_t[ACTION_DIM:ACTION_DIM + 1, :B].T       # (B, 1)
    return mean, value


def init_params(key):
    ks = jax.random.split(key, 6)

    def lin(kw, fan_in, fan_out):
        w = jax.random.normal(kw, (fan_in, fan_out), jnp.float32) * 0.1
        b = jnp.linspace(-0.05, 0.05, fan_out, dtype=jnp.float32).reshape(1, fan_out)
        return w, b

    aw1, ab1 = lin(ks[0], STATE_DIM, HIDDEN_DIM)
    aw2, ab2 = lin(ks[1], HIDDEN_DIM, HIDDEN_DIM)
    aw3, ab3 = lin(ks[2], HIDDEN_DIM, ACTION_DIM)
    cw1, cb1 = lin(ks[3], STATE_DIM, HIDDEN_DIM)
    cw2, cb2 = lin(ks[4], HIDDEN_DIM, HIDDEN_DIM)
    cw3, cb3 = lin(ks[5], HIDDEN_DIM, 1)

    ones = jnp.ones((1, HIDDEN_DIM), jnp.float32)
    zeros = jnp.zeros((1, HIDDEN_DIM), jnp.float32)
    # LayerNorm params at PyTorch defaults (gamma=1, beta=0)
    ag1, abe1 = ones, zeros
    ag2, abe2 = ones, zeros
    cg1, cbe1 = ones, zeros
    cg2, cbe2 = ones, zeros

    return (
        aw1, ab1, ag1, abe1,
        aw2, ab2, ag2, abe2,
        aw3, ab3,
        cw1, cb1, cg1, cbe1,
        cw2, cb2, cg2, cbe2,
        cw3, cb3,
    )


def reference_forward(state, params):
    (aw1, ab1, ag1, abe1, aw2, ab2, ag2, abe2, aw3, ab3,
     cw1, cb1, cg1, cbe1, cw2, cb2, cg2, cbe2, cw3, cb3) = params

    def ln(x, g, b):
        mu = jnp.mean(x, axis=-1, keepdims=True)
        var = jnp.mean((x - mu) ** 2, axis=-1, keepdims=True)
        return (x - mu) / jnp.sqrt(var + LN_EPS) * g + b

    h = jax.nn.relu(ln(state @ aw1 + ab1, ag1, abe1))
    h = jax.nn.relu(ln(h @ aw2 + ab2, ag2, abe2))
    m = jnp.tanh(h @ aw3 + ab3)
    m_scaled = jnp.concatenate([m[:, :1] * 25.0 + 25.0, m[:, 1:2] * jnp.pi], axis=1)

    v = jax.nn.relu(ln(state @ cw1 + cb1, cg1, cbe1))
    v = jax.nn.relu(ln(v @ cw2 + cb2, cg2, cbe2))
    value = v @ cw3 + cb3
    return m_scaled, value


if __name__ == "__main__":
    key = jax.random.PRNGKey(0)
    pkey, skey, bkey = jax.random.split(key, 3)
    params = init_params(pkey)
    packed = pack_params(params)

    # Small-batch path (single invocation, batch padded to one 128-lane tile).
    B = 8
    state = jax.random.normal(skey, (B, STATE_DIM), jnp.float32)
    action_mean_scaled, value = actor_critic_forward(state, packed)
    jax.block_until_ready((action_mean_scaled, value))

    ref_mean, ref_value = reference_forward(state, params)
    assert action_mean_scaled.shape == (B, ACTION_DIM)
    assert value.shape == (B, 1)
    assert jnp.allclose(action_mean_scaled, ref_mean, atol=2e-4, rtol=2e-4)
    assert jnp.allclose(value, ref_value, atol=2e-4, rtol=2e-4)

    # Large ragged-batch path (cdiv grid + padding; parallel batch axis).
    Bb = 1000
    big_state = jax.random.normal(bkey, (Bb, STATE_DIM), jnp.float32)
    big_mean, big_value = actor_critic_forward(big_state, packed, batch_block=256)
    jax.block_until_ready((big_mean, big_value))
    rb_mean, rb_value = reference_forward(big_state, params)
    assert big_mean.shape == (Bb, ACTION_DIM)
    assert big_value.shape == (Bb, 1)
    assert jnp.allclose(big_mean, rb_mean, atol=2e-4, rtol=2e-4)
    assert jnp.allclose(big_value, rb_value, atol=2e-4, rtol=2e-4)

    print("KERNEL_OK")
</pallas_src>

<mosaic_0001>
module attributes {stable_mosaic.version = 11 : i64} {
  func.func @actor_critic_kernel(%arg0: memref<4x128xf32, #tpu.memory_space<vmem>>, %arg1: memref<64x4xf32, #tpu.memory_space<vmem>>, %arg2: memref<64x64xf32, #tpu.memory_space<vmem>>, %arg3: memref<8x64xf32, #tpu.memory_space<vmem>>, %arg4: memref<64x64xf32, #tpu.memory_space<vmem>>, %arg5: memref<64x16xf32, #tpu.memory_space<vmem>>, %arg6: memref<8x128xf32, #tpu.memory_space<vmem>>) attributes {dimension_semantics = [], scalar_prefetch = 0 : i64, scratch_operands = 0 : i64, tpu.core_type = #tpu.core_type<tc>} {
    %c0 = arith.constant 0 : index
    %c0_0 = arith.constant 0 : index
    %0 = vector.load %arg0[%c0, %c0_0] : memref<4x128xf32, #tpu.memory_space<vmem>>, vector<4x128xf32>
    %c0_1 = arith.constant 0 : index
    %c0_2 = arith.constant 0 : index
    %1 = vector.load %arg4[%c0_1, %c0_2] : memref<64x64xf32, #tpu.memory_space<vmem>>, vector<64x64xf32>
    %c0_3 = arith.constant 0 : index
    %c0_4 = arith.constant 0 : index
    %2 = vector.load %arg5[%c0_3, %c0_4] : memref<64x16xf32, #tpu.memory_space<vmem>>, vector<64x16xf32>
    %3 = vector.extract_strided_slice %2 {offsets = [0, 0], sizes = [64, 1], strides = [1, 1]} : vector<64x16xf32> to vector<64x1xf32>
    %4 = vector.extract_strided_slice %2 {offsets = [0, 1], sizes = [64, 1], strides = [1, 1]} : vector<64x16xf32> to vector<64x1xf32>
    %5 = vector.extract_strided_slice %2 {offsets = [0, 2], sizes = [64, 1], strides = [1, 1]} : vector<64x16xf32> to vector<64x1xf32>
    %6 = vector.extract_strided_slice %2 {offsets = [0, 3], sizes = [64, 1], strides = [1, 1]} : vector<64x16xf32> to vector<64x1xf32>
    %7 = vector.extract_strided_slice %2 {offsets = [0, 4], sizes = [64, 1], strides = [1, 1]} : vector<64x16xf32> to vector<64x1xf32>
    %8 = vector.extract_strided_slice %2 {offsets = [0, 5], sizes = [64, 1], strides = [1, 1]} : vector<64x16xf32> to vector<64x1xf32>
    %9 = vector.extract_strided_slice %2 {offsets = [0, 6], sizes = [8, 1], strides = [1, 1]} : vector<64x16xf32> to vector<8x1xf32>
    %10 = vector.extract_strided_slice %2 {offsets = [0, 7], sizes = [8, 1], strides = [1, 1]} : vector<64x16xf32> to vector<8x1xf32>
    %11 = vector.extract_strided_slice %2 {offsets = [0, 8], sizes = [8, 1], strides = [1, 1]} : vector<64x16xf32> to vector<8x1xf32>
    %12 = vector.extract_strided_slice %2 {offsets = [0, 9], sizes = [8, 1], strides = [1, 1]} : vector<64x16xf32> to vector<8x1xf32>
    %c0_5 = arith.constant 0 : index
    %c0_6 = arith.constant 0 : index
    %13 = vector.load %arg1[%c0_5, %c0_6] : memref<64x4xf32, #tpu.memory_space<vmem>>, vector<64x4xf32>
    %cst = arith.constant dense<0.000000e+00> : vector<64x128xf32>
    %14 = tpu.matmul %13, %0, %cst {dimension_numbers = #tpu.dot_dimension_numbers<[1], [0], [0], [1], [0, 0, 1, 1], [], []>} : vector<64x4xf32>, vector<4x128xf32>, vector<64x128xf32> -> vector<64x128xf32>
    %15 = vector.broadcast %3 : vector<64x1xf32> to vector<64x128xf32>
    %16 = arith.addf %14, %15 : vector<64x128xf32>
    %cst_7 = arith.constant dense<0.000000e+00> : vector<64x128xf32>
    %17 = tpu.matmul %1, %16, %cst_7 {dimension_numbers = #tpu.dot_dimension_numbers<[1], [0], [0], [1], [0, 0, 1, 1], [], []>} : vector<64x64xf32>, vector<64x128xf32>, vector<64x128xf32> -> vector<64x128xf32>
    %18 = arith.mulf %16, %16 : vector<64x128xf32>
    %cst_8 = arith.constant dense<0.000000e+00> : vector<64x128xf32>
    %19 = tpu.matmul %1, %18, %cst_8 {dimension_numbers = #tpu.dot_dimension_numbers<[1], [0], [0], [1], [0, 0, 1, 1], [], []>} : vector<64x64xf32>, vector<64x128xf32>, vector<64x128xf32> -> vector<64x128xf32>
    %20 = arith.mulf %17, %17 : vector<64x128xf32>
    %21 = arith.subf %19, %20 : vector<64x128xf32>
    %cst_9 = arith.constant 9.99999974E-6 : f32
    %22 = vector.broadcast %cst_9 : f32 to vector<64x128xf32>
    %23 = arith.addf %21, %22 : vector<64x128xf32>
    %24 = math.rsqrt %23 : vector<64x128xf32>
    %25 = vector.broadcast %4 : vector<64x1xf32> to vector<64x128xf32>
    %26 = arith.mulf %24, %25 : vector<64x128xf32>
    %27 = arith.mulf %16, %26 : vector<64x128xf32>
    %28 = arith.mulf %17, %26 : vector<64x128xf32>
    %29 = vector.broadcast %5 : vector<64x1xf32> to vector<64x128xf32>
    %30 = arith.subf %29, %28 : vector<64x128xf32>
    %31 = arith.addf %27, %30 : vector<64x128xf32>
    %cst_10 = arith.constant 0.000000e+00 : f32
    %32 = vector.broadcast %cst_10 : f32 to vector<64x128xf32>
    %33 = arith.maximumf %31, %32 : vector<64x128xf32>
    %c0_11 = arith.constant 0 : index
    %c0_12 = arith.constant 0 : index
    %34 = vector.load %arg2[%c0_11, %c0_12] : memref<64x64xf32, #tpu.memory_space<vmem>>, vector<64x64xf32>
    %cst_13 = arith.constant dense<0.000000e+00> : vector<64x128xf32>
    %35 = tpu.matmul %34, %33, %cst_13 {dimension_numbers = #tpu.dot_dimension_numbers<[1], [0], [0], [1], [0, 0, 1, 1], [], []>} : vector<64x64xf32>, vector<64x128xf32>, vector<64x128xf32> -> vector<64x128xf32>
    %36 = vector.broadcast %6 : vector<64x1xf32> to vector<64x128xf32>
    %37 = arith.addf %35, %36 : vector<64x128xf32>
    %cst_14 = arith.constant dense<0.000000e+00> : vector<64x128xf32>
    %38 = tpu.matmul %1, %37, %cst_14 {dimension_numbers = #tpu.dot_dimension_numbers<[1], [0], [0], [1], [0, 0, 1, 1], [], []>} : vector<64x64xf32>, vector<64x128xf32>, vector<64x128xf32> -> vector<64x128xf32>
    %39 = arith.mulf %37, %37 : vector<64x128xf32>
    %cst_15 = arith.constant dense<0.000000e+00> : vector<64x128xf32>
    %40 = tpu.matmul %1, %39, %cst_15 {dimension_numbers = #tpu.dot_dimension_numbers<[1], [0], [0], [1], [0, 0, 1, 1], [], []>} : vector<64x64xf32>, vector<64x128xf32>, vector<64x128xf32> -> vector<64x128xf32>
    %41 = arith.mulf %38, %38 : vector<64x128xf32>
    %42 = arith.subf %40, %41 : vector<64x128xf32>
    %cst_16 = arith.constant 9.99999974E-6 : f32
    %43 = vector.broadcast %cst_16 : f32 to vector<64x128xf32>
    %44 = arith.addf %42, %43 : vector<64x128xf32>
    %45 = math.rsqrt %44 : vector<64x128xf32>
    %46 = vector.broadcast %7 : vector<64x1xf32> to vector<64x128xf32>
    %47 = arith.mulf %45, %46 : vector<64x128xf32>
    %48 = arith.mulf %37, %47 : vector<64x128xf32>
    %49 = arith.mulf %38, %47 : vector<64x128xf32>
    %50 = vector.broadcast %8 : vector<64x1xf32> to vector<64x128xf32>
    %51 = arith.subf %50, %49 : vector<64x128xf32>
    %52 = arith.addf %48, %51 : vector<64x128xf32>
    %cst_17 = arith.constant 0.000000e+00 : f32
    %53 = vector.broadcast %cst_17 : f32 to vector<64x128xf32>
    %54 = arith.maximumf %52, %53 : vector<64x128xf32>
    %c0_18 = arith.constant 0 : index
    %c0_19 = arith.constant 0 : index
    %55 = vector.load %arg3[%c0_18, %c0_19] : memref<8x64xf32, #tpu.memory_space<vmem>>, vector<8x64xf32>
    %cst_20 = arith.constant dense<0.000000e+00> : vector<8x128xf32>
    %56 = tpu.matmul %55, %54, %cst_20 {dimension_numbers = #tpu.dot_dimension_numbers<[1], [0], [0], [1], [0, 0, 1, 1], [], []>} : vector<8x64xf32>, vector<64x128xf32>, vector<8x128xf32> -> vector<8x128xf32>
    %57 = vector.broadcast %9 : vector<8x1xf32> to vector<8x128xf32>
    %58 = arith.addf %56, %57 : vector<8x128xf32>
    %59 = math.tanh %58 : vector<8x128xf32>
    %60 = vector.broadcast %10 : vector<8x1xf32> to vector<8x128xf32>
    %61 = arith.mulf %59, %60 : vector<8x128xf32>
    %62 = vector.broadcast %11 : vector<8x1xf32> to vector<8x128xf32>
    %63 = arith.mulf %58, %62 : vector<8x128xf32>
    %64 = arith.addf %61, %63 : vector<8x128xf32>
    %65 = vector.broadcast %12 : vector<8x1xf32> to vector<8x128xf32>
    %66 = arith.addf %64, %65 : vector<8x128xf32>
    %c0_21 = arith.constant 0 : index
    %c0_22 = arith.constant 0 : index
    %67 = vector.load %arg6[%c0_21, %c0_22] : memref<8x128xf32, #tpu.memory_space<vmem>>, vector<8x128xf32>
    tpu.vector_store %arg6[%c0_21, %c0_22], %66 {strides = array<i32>} : memref<8x128xf32, #tpu.memory_space<vmem>>, vector<8x128xf32>,
    return
  }
}

</mosaic_0001>

<llo_original>
// kernel: tpu_custom_call.1
$region0: #{tpu_custom_call.1}
  #allocation0 [shape = 'u32[]', space=smem, size = 0x4, offset = 0x4, fixed_abs, tag = 'smem constant byte address 0x4 - core index']
  #allocation1 [shape = 'u32[72,128]{1,0:T(1,128)}', space=vmem, size = 0x9000, scoped, tag = 'internal scratch']
  %s0 = inlined_call_operand.vmem [shape: f32[4,128], index: 0, kind: input, shape index: {}]
  %s1 = inlined_call_operand.vmem [shape: f32[64,4], index: 1, kind: input, shape index: {}]
  %s2 = inlined_call_operand.vmem [shape: f32[64,64], index: 2, kind: input, shape index: {}]
  %s3 = inlined_call_operand.hbm [shape: f32[8,64], index: 3, kind: input, shape index: {}]
  %s4 = inlined_call_operand.vmem [shape: f32[64,64], index: 4, kind: input, shape index: {}]
  %s5 = inlined_call_operand.vmem [shape: f32[64,16], index: 5, kind: input, shape index: {}]
  %s6 = inlined_call_operand.hbm [shape: f32[8,128], index: 6, kind: output, shape index: {}]
  %s7 = sld [smem:[#allocation0]]
  $region38: #{tpu_custom_call.1} parent=0
    _
  %s9 = ssub.s32 1, %s7
  %s10 = scalar_select 0, %s9, %s7
  $region1: #{tpu_custom_call.1} parent=0
    #allocation2 [shape = 'u8[4096]{0}', space=vmem, size = 0x1000, scoped, tag = 'input window, operand 3, single buffered']
    #allocation3 [shape = 's32[1]{0}', space=sflag, size = 0x4, scoped, tag = 'scoped memory for tpu_custom_call.1']
    #allocation4 [shape = 's32[1]{0}', space=sflag, size = 0x4, scoped, tag = 'scoped memory for tpu_custom_call.1']
    #allocation5 [shape = 'u8[4096]{0}', space=vmem, size = 0x1000, scoped, tag = 'output window, operand 0, single buffered']
    %11 = vsyncpa [#allocation3], 0
    %12 = vsyncpa [#allocation4], 0
    // Predicated region
    $region2: #{tpu_custom_call.1} parent=1 // pred_check
      _
    $region3: #{tpu_custom_call.1} parent=1 // pred_check_branch
      %14 = sbr.rel (0) target = $region5
    $region4: #{tpu_custom_call.1} parent=1 // pred_region
      _
    $region5: #{tpu_custom_call.1} parent=1 // pred_fallthru
      _
    // Predicated region
    $region6: #{tpu_custom_call.1} parent=1 // pred_check
      _
    $region7: #{tpu_custom_call.1} parent=1 // pred_check_branch
      %16 = sbr.rel (0) target = $region9
    $region8: #{tpu_custom_call.1} parent=1 // pred_region
      _
    $region9: #{tpu_custom_call.1} parent=1 // pred_fallthru
      _
    // Predicated region
    $region10: #{tpu_custom_call.1} parent=1 // pred_check
      _
    $region11: #{tpu_custom_call.1} parent=1 // pred_check_branch
      %18 = sbr.rel (0) target = $region13
    $region12: #{tpu_custom_call.1} parent=1 // pred_region
      _
    $region13: #{tpu_custom_call.1} parent=1 // pred_fallthru
      _
    // Predicated region
    $region14: #{tpu_custom_call.1} parent=1 // pred_check
      _
    $region15: #{tpu_custom_call.1} parent=1 // pred_check_branch
      %20 = sbr.rel (0) target = $region17
    $region16: #{tpu_custom_call.1} parent=1 // pred_region
      %22 = vsyncadd [#allocation3], 0
      %s24 = sshll.u32 %s3, 4
      %s25 = int_to_ptr.hbm [resolvable:$true] %s24
      %s26 = sshll.u32 [#allocation2], 4
      %s27 = int_to_ptr.vmem [resolvable:$true] %s26
      %29 = dma.hbm_to_vmem [thread:$0]  %s25, 128, %s27, [#allocation3]
    $region17: #{tpu_custom_call.1} parent=1 // pred_fallthru
      _
    // Predicated region
    $region18: #{tpu_custom_call.1} parent=1 // pred_check
      _
    $region19: #{tpu_custom_call.1} parent=1 // pred_check_branch
      %31 = sbr.rel (0) target = $region21
    $region20: #{tpu_custom_call.1} parent=1 // pred_region
      _
    $region21: #{tpu_custom_call.1} parent=1 // pred_fallthru
      _
    // Predicated region
    $region22: #{tpu_custom_call.1} parent=1 // pred_check
      _
    $region23: #{tpu_custom_call.1} parent=1 // pred_check_branch
      %33 = sbr.rel (0) target = $region25
    $region24: #{tpu_custom_call.1} parent=1 // pred_region
      _
    $region25: #{tpu_custom_call.1} parent=1 // pred_fallthru
      _
    // Predicated region
    $region26: #{tpu_custom_call.1} parent=1 // pred_check
      _
    $region27: #{tpu_custom_call.1} parent=1 // pred_check_branch
      %35 = sbr.rel (0) target = $region29
    $region28: #{tpu_custom_call.1} parent=1 // pred_region
      %37 = dma.done [#allocation3], 128
    $region29: #{tpu_custom_call.1} parent=1 // pred_fallthru
      _
    %v38 = vld [vmem:[%s0] sm:$0xf]
    %v39 = vld [vmem:[%s4] sm:$0xff]
    %v40 = vld [vmem:[%s4 + $0x8] sm:$0xff]
    %v41 = vld [vmem:[%s4 + $0x10] sm:$0xff]
    %v42 = vld [vmem:[%s4 + $0x18] sm:$0xff]
    %v43 = vld [vmem:[%s4 + $0x20] sm:$0xff]
    %v44 = vld [vmem:[%s4 + $0x28] sm:$0xff]
    %v45 = vld [vmem:[%s4 + $0x30] sm:$0xff]
    %v46 = vld [vmem:[%s4 + $0x38] sm:$0xff]
    %v47 = vld [vmem:[%s5] sm:$0xff]
    %v48 = vld [vmem:[%s5 + $0x8] sm:$0xff]
    %v49 = vld [vmem:[%s5 + $0x10] sm:$0xff]
    %v50 = vld [vmem:[%s5 + $0x18] sm:$0xff]
    %v51 = vld [vmem:[%s5 + $0x20] sm:$0xff]
    %v52 = vld [vmem:[%s5 + $0x28] sm:$0xff]
    %v53 = vld [vmem:[%s5 + $0x30] sm:$0xff]
    %v54 = vld [vmem:[%s5 + $0x38] sm:$0xff]
    %v55 = vld [vmem:[%s1] sm:$0xff]
    %v56 = vld [vmem:[%s1 + $0x8] sm:$0xff]
    %v57 = vld [vmem:[%s1 + $0x10] sm:$0xff]
    %v58 = vld [vmem:[%s1 + $0x18] sm:$0xff]
    %v59 = vld [vmem:[%s1 + $0x20] sm:$0xff]
    %v60 = vld [vmem:[%s1 + $0x28] sm:$0xff]
    %v61 = vld [vmem:[%s1 + $0x30] sm:$0xff]
    %v62 = vld [vmem:[%s1 + $0x38] sm:$0xff]
    %64 = vset.pattern.permute.xlu0 0
    %65 = vperm.xlu0 %64, %v47
    %v66 = vpop.permute.xlu0 %65
    %69 = vset.pattern.permute.xlu0 0
    %70 = vperm.xlu0 %69, %v48
    %v71 = vpop.permute.xlu0 %70
    %74 = vset.pattern.permute.xlu0 0
    %75 = vperm.xlu0 %74, %v49
    %v76 = vpop.permute.xlu0 %75
    %79 = vset.pattern.permute.xlu0 0
    %80 = vperm.xlu0 %79, %v50
    %v81 = vpop.permute.xlu0 %80
    %84 = vset.pattern.permute.xlu0 0
    %85 = vperm.xlu0 %84, %v51
    %v86 = vpop.permute.xlu0 %85
    %89 = vset.pattern.permute.xlu0 0
    %90 = vperm.xlu0 %89, %v52
    %v91 = vpop.permute.xlu0 %90
    %94 = vset.pattern.permute.xlu0 0
    %95 = vperm.xlu0 %94, %v53
    %v96 = vpop.permute.xlu0 %95
    %99 = vset.pattern.permute.xlu0 0
    %100 = vperm.xlu0 %99, %v54
    %v101 = vpop.permute.xlu0 %100
    %vm103 = vcmask 31744
    %v105 = vsel %vm103, %v55, 0
    %v108 = vsel %vm103, %v56, 0
    %v111 = vsel %vm103, %v57, 0
    %v114 = vsel %vm103, %v58, 0
    %v117 = vsel %vm103, %v59, 0
    %v120 = vsel %vm103, %v60, 0
    %v123 = vsel %vm103, %v61, 0
    %v126 = vsel %vm103, %v62, 0
    %vm128 = vcmask 1043456
    %v130 = vsel %vm128, %v38, 0
    %132 = vmatpush.msra.mxu0 0.0
    %133 = vmatpush.msra.mxu0 0.0
    %134 = vmatpush.msra.mxu0 0.0
    %135 = vmatpush.msra.mxu0 0.0
    %136 = vmatpush.msra.mxu0 0.0
    %137 = vmatpush.msra.mxu0 0.0
    %138 = vmatpush.msra.mxu0 0.0
    %139 = vmatpush.msra.mxu0 0.0
    %140 = vmatpush.msra.mxu0 0.0
    %141 = vmatpush.msra.mxu0 0.0
    %142 = vmatpush.msra.mxu0 0.0
    %143 = vmatpush.msra.mxu0 0.0
    %144 = vmatpush.msra.mxu0 0.0
    %145 = vmatpush.msra.mxu0 0.0
    %146 = vmatpush.msra.mxu0 0.0
    %147 = vmatpush.msra.mxu0 %v130
    %148 = vmatmul.f32.gmra.mxu0 %v105
    %v149 = vpop.f32.mrf.mxu0
    %v150 = vadd.f32 %v66, %v149
    %151 = vmatmul.f32.gmra.mxu0 %v108
    %v152 = vpop.f32.mrf.mxu0
    %v153 = vadd.f32 %v71, %v152
    %154 = vmatmul.f32.gmra.mxu0 %v111
    %v155 = vpop.f32.mrf.mxu0
    %v156 = vadd.f32 %v76, %v155
    %157 = vmatmul.f32.gmra.mxu0 %v114
    %v158 = vpop.f32.mrf.mxu0
    %v159 = vadd.f32 %v81, %v158
    %160 = vmatmul.f32.gmra.mxu0 %v117
    %v161 = vpop.f32.mrf.mxu0
    %v162 = vadd.f32 %v86, %v161
    %163 = vmatmul.f32.gmra.mxu0 %v120
    %v164 = vpop.f32.mrf.mxu0
    %v165 = vadd.f32 %v91, %v164
    %166 = vmatmul.f32.gmra.mxu0 %v123
    %v167 = vpop.f32.mrf.mxu0
    %v168 = vadd.f32 %v96, %v167
    %169 = vmatmul.f32.gmra.mxu0 %v126
    %v170 = vpop.f32.mrf.mxu0
    %v171 = vadd.f32 %v101, %v170
    %172 = vdwg.mxu0
    %vm173 = vcmask 523264
    %v175 = vsel %vm173, %v39, 0
    %v178 = vsel %vm173, %v40, 0
    %v181 = vsel %vm173, %v41, 0
    %v184 = vsel %vm173, %v42, 0
    %v187 = vsel %vm173, %v43, 0
    %v190 = vsel %vm173, %v44, 0
    %v193 = vsel %vm173, %v45, 0
    %v196 = vsel %vm173, %v46, 0
    %198 = vmatpush.msra.mxu0 0.0
    %199 = vmatpush.msra.mxu0 0.0
    %200 = vmatpush.msra.mxu0 0.0
    %201 = vmatpush.msra.mxu0 0.0
    %202 = vmatpush.msra.mxu0 0.0
    %203 = vmatpush.msra.mxu0 0.0
    %204 = vmatpush.msra.mxu0 0.0
    %205 = vmatpush.msra.mxu0 0.0
    %206 = vmatpush.msra.mxu0 %v171
    %207 = vmatpush.msra.mxu0 %v168
    %208 = vmatpush.msra.mxu0 %v165
    %209 = vmatpush.msra.mxu0 %v162
    %210 = vmatpush.msra.mxu0 %v159
    %211 = vmatpush.msra.mxu0 %v156
    %212 = vmatpush.msra.mxu0 %v153
    %213 = vmatpush.msra.mxu0 %v150
    %214 = vmatmul.f32.gmra.mxu0 %v175
    %v215 = vpop.f32.mrf.mxu0
    %v216 = vadd.f32 0.0, %v215
    %217 = vmatmul.f32.gmra.mxu0 %v178
    %v218 = vpop.f32.mrf.mxu0
    %v219 = vadd.f32 0.0, %v218
    %220 = vmatmul.f32.gmra.mxu0 %v181
    %v221 = vpop.f32.mrf.mxu0
    %v222 = vadd.f32 0.0, %v221
    %223 = vmatmul.f32.gmra.mxu0 %v184
    %v224 = vpop.f32.mrf.mxu0
    %v225 = vadd.f32 0.0, %v224
    %226 = vmatmul.f32.gmra.mxu0 %v187
    %v227 = vpop.f32.mrf.mxu0
    %v228 = vadd.f32 0.0, %v227
    %229 = vmatmul.f32.gmra.mxu0 %v190
    %v230 = vpop.f32.mrf.mxu0
    %v231 = vadd.f32 0.0, %v230
    %232 = vmatmul.f32.gmra.mxu0 %v193
    %v233 = vpop.f32.mrf.mxu0
    %v234 = vadd.f32 0.0, %v233
    %235 = vmatmul.f32.gmra.mxu0 %v196
    %v236 = vpop.f32.mrf.mxu0
    %v237 = vadd.f32 0.0, %v236
    %238 = vdwg.mxu0
    %v239 = vmul.f32 %v150, %v150
    %v240 = vmul.f32 %v153, %v153
    %v241 = vmul.f32 %v156, %v156
    %v242 = vmul.f32 %v159, %v159
    %v243 = vmul.f32 %v162, %v162
    %v244 = vmul.f32 %v165, %v165
    %v245 = vmul.f32 %v168, %v168
    %v246 = vmul.f32 %v171, %v171
    %247 = vmatpush.msra.mxu0 0.0
    %248 = vmatpush.msra.mxu0 0.0
    %249 = vmatpush.msra.mxu0 0.0
    %250 = vmatpush.msra.mxu0 0.0
    %251 = vmatpush.msra.mxu0 0.0
    %252 = vmatpush.msra.mxu0 0.0
    %253 = vmatpush.msra.mxu0 0.0
    %254 = vmatpush.msra.mxu0 0.0
    %255 = vmatpush.msra.mxu0 %v246
    %256 = vmatpush.msra.mxu0 %v245
    %257 = vmatpush.msra.mxu0 %v244
    %258 = vmatpush.msra.mxu0 %v243
    %259 = vmatpush.msra.mxu0 %v242
    %260 = vmatpush.msra.mxu0 %v241
    %261 = vmatpush.msra.mxu0 %v240
    %262 = vmatpush.msra.mxu0 %v239
    %263 = vmatmul.f32.gmra.mxu0 %v175
    %v264 = vpop.f32.mrf.mxu0
    %v265 = vadd.f32 0.0, %v264
    %266 = vmatmul.f32.gmra.mxu0 %v178
    %v267 = vpop.f32.mrf.mxu0
    %v268 = vadd.f32 0.0, %v267
    %269 = vmatmul.f32.gmra.mxu0 %v181
    %v270 = vpop.f32.mrf.mxu0
    %v271 = vadd.f32 0.0, %v270
    %272 = vmatmul.f32.gmra.mxu0 %v184
    %v273 = vpop.f32.mrf.mxu0
    %v274 = vadd.f32 0.0, %v273
    %275 = vmatmul.f32.gmra.mxu0 %v187
    %v276 = vpop.f32.mrf.mxu0
    %v277 = vadd.f32 0.0, %v276
    %278 = vmatmul.f32.gmra.mxu0 %v190
    %v279 = vpop.f32.mrf.mxu0
    %v280 = vadd.f32 0.0, %v279
    %281 = vmatmul.f32.gmra.mxu0 %v193
    %v282 = vpop.f32.mrf.mxu0
    %v283 = vadd.f32 0.0, %v282
    %284 = vmatmul.f32.gmra.mxu0 %v196
    %v285 = vpop.f32.mrf.mxu0
    %v286 = vadd.f32 0.0, %v285
    %287 = vdwg.mxu0
    %v288 = vmul.f32 %v216, %v216
    %v289 = vmul.f32 %v219, %v219
    %v290 = vmul.f32 %v222, %v222
    %v291 = vmul.f32 %v225, %v225
    %v292 = vmul.f32 %v228, %v228
    %v293 = vmul.f32 %v231, %v231
    %v294 = vmul.f32 %v234, %v234
    %v295 = vmul.f32 %v237, %v237
    %v296 = vsub.f32 %v265, %v288
    %v297 = vsub.f32 %v268, %v289
    %v298 = vsub.f32 %v271, %v290
    %v299 = vsub.f32 %v274, %v291
    %v300 = vsub.f32 %v277, %v292
    %v301 = vsub.f32 %v280, %v293
    %v302 = vsub.f32 %v283, %v294
    %v303 = vsub.f32 %v286, %v295
    %v304 = vadd.f32 %v296, 1e-05
    %v305 = vadd.f32 %v297, 1e-05
    %v306 = vadd.f32 %v298, 1e-05
    %v307 = vadd.f32 %v299, 1e-05
    %v308 = vadd.f32 %v300, 1e-05
    %v309 = vadd.f32 %v301, 1e-05
    %v310 = vadd.f32 %v302, 1e-05
    %v311 = vadd.f32 %v303, 1e-05
    %v312 = vrsqrt.pop %v304
    %v313 = vmul.f32 %v312, %v304
    %v314 = vmul.f32 %v313, %v312
    %v315 = vmul.f32 0.5, %v314
    %v316 = vsub.f32 1.5, %v315
    %v317 = vmul.f32 %v312, %v316
    %vm318 = vweird.f32 %v304
    %vm319 = vweird.f32 %v312
    %vm320 = vmor %vm318, %vm319
    %v321 = vsel %vm320, %v312, %v317
    %v322 = vrsqrt.pop %v305
    %v323 = vmul.f32 %v322, %v305
    %v324 = vmul.f32 %v323, %v322
    %v325 = vmul.f32 0.5, %v324
    %v326 = vsub.f32 1.5, %v325
    %v327 = vmul.f32 %v322, %v326
    %vm328 = vweird.f32 %v305
    %vm329 = vweird.f32 %v322
    %vm330 = vmor %vm328, %vm329
    %v331 = vsel %vm330, %v322, %v327
    %v332 = vrsqrt.pop %v306
    %v333 = vmul.f32 %v332, %v306
    %v334 = vmul.f32 %v333, %v332
    %v335 = vmul.f32 0.5, %v334
    %v336 = vsub.f32 1.5, %v335
    %v337 = vmul.f32 %v332, %v336
    %vm338 = vweird.f32 %v306
    %vm339 = vweird.f32 %v332
    %vm340 = vmor %vm338, %vm339
    %v341 = vsel %vm340, %v332, %v337
    %v342 = vrsqrt.pop %v307
    %v343 = vmul.f32 %v342, %v307
    %v344 = vmul.f32 %v343, %v342
    %v345 = vmul.f32 0.5, %v344
    %v346 = vsub.f32 1.5, %v345
    %v347 = vmul.f32 %v342, %v346
    %vm348 = vweird.f32 %v307
    %vm349 = vweird.f32 %v342
    %vm350 = vmor %vm348, %vm349
    %v351 = vsel %vm350, %v342, %v347
    %v352 = vrsqrt.pop %v308
    %v353 = vmul.f32 %v352, %v308
    %v354 = vmul.f32 %v353, %v352
    %v355 = vmul.f32 0.5, %v354
    %v356 = vsub.f32 1.5, %v355
    %v357 = vmul.f32 %v352, %v356
    %vm358 = vweird.f32 %v308
    %vm359 = vweird.f32 %v352
    %vm360 = vmor %vm358, %vm359
    %v361 = vsel %vm360, %v352, %v357
    %v362 = vrsqrt.pop %v309
    %v363 = vmul.f32 %v362, %v309
    %v364 = vmul.f32 %v363, %v362
    %v365 = vmul.f32 0.5, %v364
    %v366 = vsub.f32 1.5, %v365
    %v367 = vmul.f32 %v362, %v366
    %vm368 = vweird.f32 %v309
    %vm369 = vweird.f32 %v362
    %vm370 = vmor %vm368, %vm369
    %v371 = vsel %vm370, %v362, %v367
    %v372 = vrsqrt.pop %v310
    %v373 = vmul.f32 %v372, %v310
    %v374 = vmul.f32 %v373, %v372
    %v375 = vmul.f32 0.5, %v374
    %v376 = vsub.f32 1.5, %v375
    %v377 = vmul.f32 %v372, %v376
    %vm378 = vweird.f32 %v310
    %vm379 = vweird.f32 %v372
    %vm380 = vmor %vm378, %vm379
    %v381 = vsel %vm380, %v372, %v377
    %v382 = vrsqrt.pop %v311
    %v383 = vmul.f32 %v382, %v311
    %v384 = vmul.f32 %v383, %v382
    %v385 = vmul.f32 0.5, %v384
    %v386 = vsub.f32 1.5, %v385
    %v387 = vmul.f32 %v382, %v386
    %vm388 = vweird.f32 %v311
    %vm389 = vweird.f32 %v382
    %vm390 = vmor %vm388, %vm389
    %v391 = vsel %vm390, %v382, %v387
    %392 = vset.pattern.permute.xlu0 1
    %393 = vperm.xlu0 %392, %v47
    %v394 = vpop.permute.xlu0 %393
    %396 = vset.pattern.permute.xlu0 1
    %397 = vperm.xlu0 %396, %v48
    %v398 = vpop.permute.xlu0 %397
    %400 = vset.pattern.permute.xlu0 1
    %401 = vperm.xlu0 %400, %v49
    %v402 = vpop.permute.xlu0 %401
    %404 = vset.pattern.permute.xlu0 1
    %405 = vperm.xlu0 %404, %v50
    %v406 = vpop.permute.xlu0 %405
    %408 = vset.pattern.permute.xlu0 1
    %409 = vperm.xlu0 %408, %v51
    %v410 = vpop.permute.xlu0 %409
    %412 = vset.pattern.permute.xlu0 1
    %413 = vperm.xlu0 %412, %v52
    %v414 = vpop.permute.xlu0 %413
    %416 = vset.pattern.permute.xlu0 1
    %417 = vperm.xlu0 %416, %v53
    %v418 = vpop.permute.xlu0 %417
    %420 = vset.pattern.permute.xlu0 1
    %421 = vperm.xlu0 %420, %v54
    %v422 = vpop.permute.xlu0 %421
    %v424 = vmul.f32 %v321, %v394
    %v425 = vmul.f32 %v331, %v398
    %v426 = vmul.f32 %v341, %v402
    %v427 = vmul.f32 %v351, %v406
    %v428 = vmul.f32 %v361, %v410
    %v429 = vmul.f32 %v371, %v414
    %v430 = vmul.f32 %v381, %v418
    %v431 = vmul.f32 %v391, %v422
    %v432 = vmul.f32 %v150, %v424
    %v433 = vmul.f32 %v153, %v425
    %v434 = vmul.f32 %v156, %v426
    %v435 = vmul.f32 %v159, %v427
    %v436 = vmul.f32 %v162, %v428
    %v437 = vmul.f32 %v165, %v429
    %v438 = vmul.f32 %v168, %v430
    %v439 = vmul.f32 %v171, %v431
    %v440 = vmul.f32 %v216, %v424
    %v441 = vmul.f32 %v219, %v425
    %v442 = vmul.f32 %v222, %v426
    %v443 = vmul.f32 %v225, %v427
    %v444 = vmul.f32 %v228, %v428
    %v445 = vmul.f32 %v231, %v429
    %v446 = vmul.f32 %v234, %v430
    %v447 = vmul.f32 %v237, %v431
    %448 = vset.pattern.permute.xlu0 2
    %449 = vperm.xlu0 %448, %v47
    %v450 = vpop.permute.xlu0 %449
    %452 = vset.pattern.permute.xlu0 2
    %453 = vperm.xlu0 %452, %v48
    %v454 = vpop.permute.xlu0 %453
    %456 = vset.pattern.permute.xlu0 2
    %457 = vperm.xlu0 %456, %v49
    %v458 = vpop.permute.xlu0 %457
    %460 = vset.pattern.permute.xlu0 2
    %461 = vperm.xlu0 %460, %v50
    %v462 = vpop.permute.xlu0 %461
    %464 = vset.pattern.permute.xlu0 2
    %465 = vperm.xlu0 %464, %v51
    %v466 = vpop.permute.xlu0 %465
    %468 = vset.pattern.permute.xlu0 2
    %469 = vperm.xlu0 %468, %v52
    %v470 = vpop.permute.xlu0 %469
    %472 = vset.pattern.permute.xlu0 2
    %473 = vperm.xlu0 %472, %v53
    %v474 = vpop.permute.xlu0 %473
    %476 = vset.pattern.permute.xlu0 2
    %477 = vperm.xlu0 %476, %v54
    %v478 = vpop.permute.xlu0 %477
    %v480 = vsub.f32 %v450, %v440
    %v481 = vsub.f32 %v454, %v441
    %v482 = vsub.f32 %v458, %v442
    %v483 = vsub.f32 %v462, %v443
    %v484 = vsub.f32 %v466, %v444
    %v485 = vsub.f32 %v470, %v445
    %v486 = vsub.f32 %v474, %v446
    %v487 = vsub.f32 %v478, %v447
    %v488 = vadd.f32 %v432, %v480
    %v489 = vadd.f32 %v433, %v481
    %v490 = vadd.f32 %v434, %v482
    %v491 = vadd.f32 %v435, %v483
    %v492 = vadd.f32 %v436, %v484
    %v493 = vadd.f32 %v437, %v485
    %v494 = vadd.f32 %v438, %v486
    %v495 = vadd.f32 %v439, %v487
    %v496 = vmax.f32 %v488, 0.0
    %v497 = vmax.f32 %v489, 0.0
    %v498 = vmax.f32 %v490, 0.0
    %v499 = vmax.f32 %v491, 0.0
    %v500 = vmax.f32 %v492, 0.0
    %v501 = vmax.f32 %v493, 0.0
    %v502 = vmax.f32 %v494, 0.0
    %v503 = vmax.f32 %v495, 0.0
    %v504 = vld [vmem:[%s2] sm:$0xff]
    %v505 = vld [vmem:[%s2 + $0x8] sm:$0xff]
    %v506 = vld [vmem:[%s2 + $0x10] sm:$0xff]
    %v507 = vld [vmem:[%s2 + $0x18] sm:$0xff]
    %v508 = vld [vmem:[%s2 + $0x20] sm:$0xff]
    %v509 = vld [vmem:[%s2 + $0x28] sm:$0xff]
    %v510 = vld [vmem:[%s2 + $0x30] sm:$0xff]
    %v511 = vld [vmem:[%s2 + $0x38] sm:$0xff]
    %512 = vset.pattern.permute.xlu0 3
    %513 = vperm.xlu0 %512, %v47
    %v514 = vpop.permute.xlu0 %513
    %516 = vset.pattern.permute.xlu0 3
    %517 = vperm.xlu0 %516, %v48
    %v518 = vpop.permute.xlu0 %517
    %520 = vset.pattern.permute.xlu0 3
    %521 = vperm.xlu0 %520, %v49
    %v522 = vpop.permute.xlu0 %521
    %524 = vset.pattern.permute.xlu0 3
    %525 = vperm.xlu0 %524, %v50
    %v526 = vpop.permute.xlu0 %525
    %528 = vset.pattern.permute.xlu0 3
    %529 = vperm.xlu0 %528, %v51
    %v530 = vpop.permute.xlu0 %529
    %532 = vset.pattern.permute.xlu0 3
    %533 = vperm.xlu0 %532, %v52
    %v534 = vpop.permute.xlu0 %533
    %536 = vset.pattern.permute.xlu0 3
    %537 = vperm.xlu0 %536, %v53
    %v538 = vpop.permute.xlu0 %537
    %540 = vset.pattern.permute.xlu0 3
    %541 = vperm.xlu0 %540, %v54
    %v542 = vpop.permute.xlu0 %541
    %v545 = vsel %vm173, %v504, 0
    %v548 = vsel %vm173, %v505, 0
    %v551 = vsel %vm173, %v506, 0
    %v554 = vsel %vm173, %v507, 0
    %v557 = vsel %vm173, %v508, 0
    %v560 = vsel %vm173, %v509, 0
    %v563 = vsel %vm173, %v510, 0
    %v566 = vsel %vm173, %v511, 0
    %568 = vmatpush.msra.mxu0 0.0
    %569 = vmatpush.msra.mxu0 0.0
    %570 = vmatpush.msra.mxu0 0.0
    %571 = vmatpush.msra.mxu0 0.0
    %572 = vmatpush.msra.mxu0 0.0
    %573 = vmatpush.msra.mxu0 0.0
    %574 = vmatpush.msra.mxu0 0.0
    %575 = vmatpush.msra.mxu0 0.0
    %576 = vmatpush.msra.mxu0 %v503
    %577 = vmatpush.msra.mxu0 %v502
    %578 = vmatpush.msra.mxu0 %v501
    %579 = vmatpush.msra.mxu0 %v500
    %580 = vmatpush.msra.mxu0 %v499
    %581 = vmatpush.msra.mxu0 %v498
    %582 = vmatpush.msra.mxu0 %v497
    %583 = vmatpush.msra.mxu0 %v496
    %584 = vmatmul.f32.gmra.mxu0 %v545
    %v585 = vpop.f32.mrf.mxu0
    %v586 = vadd.f32 %v514, %v585
    %587 = vmatmul.f32.gmra.mxu0 %v548
    %v588 = vpop.f32.mrf.mxu0
    %v589 = vadd.f32 %v518, %v588
    %590 = vmatmul.f32.gmra.mxu0 %v551
    %v591 = vpop.f32.mrf.mxu0
    %v592 = vadd.f32 %v522, %v591
    %593 = vmatmul.f32.gmra.mxu0 %v554
    %v594 = vpop.f32.mrf.mxu0
    %v595 = vadd.f32 %v526, %v594
    %596 = vmatmul.f32.gmra.mxu0 %v557
    %v597 = vpop.f32.mrf.mxu0
    %v598 = vadd.f32 %v530, %v597
    %599 = vmatmul.f32.gmra.mxu0 %v560
    %v600 = vpop.f32.mrf.mxu0
    %v601 = vadd.f32 %v534, %v600
    %602 = vmatmul.f32.gmra.mxu0 %v563
    %v603 = vpop.f32.mrf.mxu0
    %v604 = vadd.f32 %v538, %v603
    %605 = vmatmul.f32.gmra.mxu0 %v566
    %v606 = vpop.f32.mrf.mxu0
    %v607 = vadd.f32 %v542, %v606
    %608 = vdwg.mxu0
    %609 = vmatpush.msra.mxu0 0.0
    %610 = vmatpush.msra.mxu0 0.0
    %611 = vmatpush.msra.mxu0 0.0
    %612 = vmatpush.msra.mxu0 0.0
    %613 = vmatpush.msra.mxu0 0.0
    %614 = vmatpush.msra.mxu0 0.0
    %615 = vmatpush.msra.mxu0 0.0
    %616 = vmatpush.msra.mxu0 0.0
    %617 = vmatpush.msra.mxu0 %v607
    %618 = vmatpush.msra.mxu0 %v604
    %619 = vmatpush.msra.mxu0 %v601
    %620 = vmatpush.msra.mxu0 %v598
    %621 = vmatpush.msra.mxu0 %v595
    %622 = vmatpush.msra.mxu0 %v592
    %623 = vmatpush.msra.mxu0 %v589
    %624 = vmatpush.msra.mxu0 %v586
    %625 = vmatmul.f32.gmra.mxu0 %v175
    %v626 = vpop.f32.mrf.mxu0
    %v627 = vadd.f32 0.0, %v626
    %628 = vmatmul.f32.gmra.mxu0 %v178
    %v629 = vpop.f32.mrf.mxu0
    %v630 = vadd.f32 0.0, %v629
    %631 = vmatmul.f32.gmra.mxu0 %v181
    %v632 = vpop.f32.mrf.mxu0
    %v633 = vadd.f32 0.0, %v632
    %634 = vmatmul.f32.gmra.mxu0 %v184
    %v635 = vpop.f32.mrf.mxu0
    %v636 = vadd.f32 0.0, %v635
    %637 = vmatmul.f32.gmra.mxu0 %v187
    %v638 = vpop.f32.mrf.mxu0
    %v639 = vadd.f32 0.0, %v638
    %640 = vmatmul.f32.gmra.mxu0 %v190
    %v641 = vpop.f32.mrf.mxu0
    %v642 = vadd.f32 0.0, %v641
    %643 = vmatmul.f32.gmra.mxu0 %v193
    %v644 = vpop.f32.mrf.mxu0
    %v645 = vadd.f32 0.0, %v644
    %646 = vmatmul.f32.gmra.mxu0 %v196
    %v647 = vpop.f32.mrf.mxu0
    %v648 = vadd.f32 0.0, %v647
    %649 = vdwg.mxu0
    %v650 = vmul.f32 %v586, %v586
    %v651 = vmul.f32 %v589, %v589
    %v652 = vmul.f32 %v592, %v592
    %v653 = vmul.f32 %v595, %v595
    %v654 = vmul.f32 %v598, %v598
    %v655 = vmul.f32 %v601, %v601
    %v656 = vmul.f32 %v604, %v604
    %v657 = vmul.f32 %v607, %v607
    %658 = vmatpush.msra.mxu0 0.0
    %659 = vmatpush.msra.mxu0 0.0
    %660 = vmatpush.msra.mxu0 0.0
    %661 = vmatpush.msra.mxu0 0.0
    %662 = vmatpush.msra.mxu0 0.0
    %663 = vmatpush.msra.mxu0 0.0
    %664 = vmatpush.msra.mxu0 0.0
    %665 = vmatpush.msra.mxu0 0.0
    %666 = vmatpush.msra.mxu0 %v657
    %667 = vmatpush.msra.mxu0 %v656
    %668 = vmatpush.msra.mxu0 %v655
    %669 = vmatpush.msra.mxu0 %v654
    %670 = vmatpush.msra.mxu0 %v653
    %671 = vmatpush.msra.mxu0 %v652
    %672 = vmatpush.msra.mxu0 %v651
    %673 = vmatpush.msra.mxu0 %v650
    %674 = vmatmul.f32.gmra.mxu0 %v175
    %v675 = vpop.f32.mrf.mxu0
    %v676 = vadd.f32 0.0, %v675
    %677 = vmatmul.f32.gmra.mxu0 %v178
    %v678 = vpop.f32.mrf.mxu0
    %v679 = vadd.f32 0.0, %v678
    %680 = vmatmul.f32.gmra.mxu0 %v181
    %v681 = vpop.f32.mrf.mxu0
    %v682 = vadd.f32 0.0, %v681
    %683 = vmatmul.f32.gmra.mxu0 %v184
    %v684 = vpop.f32.mrf.mxu0
    %v685 = vadd.f32 0.0, %v684
    %686 = vmatmul.f32.gmra.mxu0 %v187
    %v687 = vpop.f32.mrf.mxu0
    %v688 = vadd.f32 0.0, %v687
    %689 = vmatmul.f32.gmra.mxu0 %v190
    %v690 = vpop.f32.mrf.mxu0
    %v691 = vadd.f32 0.0, %v690
    %692 = vmatmul.f32.gmra.mxu0 %v193
    %v693 = vpop.f32.mrf.mxu0
    %v694 = vadd.f32 0.0, %v693
    %695 = vmatmul.f32.gmra.mxu0 %v196
    %v696 = vpop.f32.mrf.mxu0
    %v697 = vadd.f32 0.0, %v696
    %698 = vdwg.mxu0
    %v699 = vmul.f32 %v627, %v627
    %v700 = vmul.f32 %v630, %v630
    %v701 = vmul.f32 %v633, %v633
    %v702 = vmul.f32 %v636, %v636
    %v703 = vmul.f32 %v639, %v639
    %v704 = vmul.f32 %v642, %v642
    %v705 = vmul.f32 %v645, %v645
    %v706 = vmul.f32 %v648, %v648
    %v707 = vsub.f32 %v676, %v699
    %v708 = vsub.f32 %v679, %v700
    %v709 = vsub.f32 %v682, %v701
    %v710 = vsub.f32 %v685, %v702
    %v711 = vsub.f32 %v688, %v703
    %v712 = vsub.f32 %v691, %v704
    %v713 = vsub.f32 %v694, %v705
    %v714 = vsub.f32 %v697, %v706
    %v715 = vadd.f32 %v707, 1e-05
    %v716 = vadd.f32 %v708, 1e-05
    %v717 = vadd.f32 %v709, 1e-05
    %v718 = vadd.f32 %v710, 1e-05
    %v719 = vadd.f32 %v711, 1e-05
    %v720 = vadd.f32 %v712, 1e-05
    %v721 = vadd.f32 %v713, 1e-05
    %v722 = vadd.f32 %v714, 1e-05
    %v723 = vrsqrt.pop %v715
    %v724 = vmul.f32 %v723, %v715
    %v725 = vmul.f32 %v724, %v723
    %v726 = vmul.f32 0.5, %v725
    %v727 = vsub.f32 1.5, %v726
    %v728 = vmul.f32 %v723, %v727
    %vm729 = vweird.f32 %v715
    %vm730 = vweird.f32 %v723
    %vm731 = vmor %vm729, %vm730
    %v732 = vsel %vm731, %v723, %v728
    %v733 = vrsqrt.pop %v716
    %v734 = vmul.f32 %v733, %v716
    %v735 = vmul.f32 %v734, %v733
    %v736 = vmul.f32 0.5, %v735
    %v737 = vsub.f32 1.5, %v736
    %v738 = vmul.f32 %v733, %v737
    %vm739 = vweird.f32 %v716
    %vm740 = vweird.f32 %v733
    %vm741 = vmor %vm739, %vm740
    %v742 = vsel %vm741, %v733, %v738
    %v743 = vrsqrt.pop %v717
    %v744 = vmul.f32 %v743, %v717
    %v745 = vmul.f32 %v744, %v743
    %v746 = vmul.f32 0.5, %v745
    %v747 = vsub.f32 1.5, %v746
    %v748 = vmul.f32 %v743, %v747
    %vm749 = vweird.f32 %v717
    %vm750 = vweird.f32 %v743
    %vm751 = vmor %vm749, %vm750
    %v752 = vsel %vm751, %v743, %v748
    %v753 = vrsqrt.pop %v718
    %v754 = vmul.f32 %v753, %v718
    %v755 = vmul.f32 %v754, %v753
    %v756 = vmul.f32 0.5, %v755
    %v757 = vsub.f32 1.5, %v756
    %v758 = vmul.f32 %v753, %v757
    %vm759 = vweird.f32 %v718
    %vm760 = vweird.f32 %v753
    %vm761 = vmor %vm759, %vm760
    %v762 = vsel %vm761, %v753, %v758
    %v763 = vrsqrt.pop %v719
    %v764 = vmul.f32 %v763, %v719
    %v765 = vmul.f32 %v764, %v763
    %v766 = vmul.f32 0.5, %v765
    %v767 = vsub.f32 1.5, %v766
    %v768 = vmul.f32 %v763, %v767
    %vm769 = vweird.f32 %v719
    %vm770 = vweird.f32 %v763
    %vm771 = vmor %vm769, %vm770
    %v772 = vsel %vm771, %v763, %v768
    %v773 = vrsqrt.pop %v720
    %v774 = vmul.f32 %v773, %v720
    %v775 = vmul.f32 %v774, %v773
    %v776 = vmul.f32 0.5, %v775
    %v777 = vsub.f32 1.5, %v776
    %v778 = vmul.f32 %v773, %v777
    %vm779 = vweird.f32 %v720
    %vm780 = vweird.f32 %v773
    %vm781 = vmor %vm779, %vm780
    %v782 = vsel %vm781, %v773, %v778
    %v783 = vrsqrt.pop %v721
    %v784 = vmul.f32 %v783, %v721
    %v785 = vmul.f32 %v784, %v783
    %v786 = vmul.f32 0.5, %v785
    %v787 = vsub.f32 1.5, %v786
    %v788 = vmul.f32 %v783, %v787
    %vm789 = vweird.f32 %v721
    %vm790 = vweird.f32 %v783
    %vm791 = vmor %vm789, %vm790
    %v792 = vsel %vm791, %v783, %v788
    %v793 = vrsqrt.pop %v722
    %v794 = vmul.f32 %v793, %v722
    %v795 = vmul.f32 %v794, %v793
    %v796 = vmul.f32 0.5, %v795
    %v797 = vsub.f32 1.5, %v796
    %v798 = vmul.f32 %v793, %v797
    %vm799 = vweird.f32 %v722
    %vm800 = vweird.f32 %v793
    %vm801 = vmor %vm799, %vm800
    %v802 = vsel %vm801, %v793, %v798
    %803 = vset.pattern.permute.xlu0 4
    %804 = vperm.xlu0 %803, %v47
    %v805 = vpop.permute.xlu0 %804
    %807 = vset.pattern.permute.xlu0 4
    %808 = vperm.xlu0 %807, %v48
    %v809 = vpop.permute.xlu0 %808
    %811 = vset.pattern.permute.xlu0 4
    %812 = vperm.xlu0 %811, %v49
    %v813 = vpop.permute.xlu0 %812
    %815 = vset.pattern.permute.xlu0 4
    %816 = vperm.xlu0 %815, %v50
    %v817 = vpop.permute.xlu0 %816
    %819 = vset.pattern.permute.xlu0 4
    %820 = vperm.xlu0 %819, %v51
    %v821 = vpop.permute.xlu0 %820
    %823 = vset.pattern.permute.xlu0 4
    %824 = vperm.xlu0 %823, %v52
    %v825 = vpop.permute.xlu0 %824
    %827 = vset.pattern.permute.xlu0 4
    %828 = vperm.xlu0 %827, %v53
    %v829 = vpop.permute.xlu0 %828
    %831 = vset.pattern.permute.xlu0 4
    %832 = vperm.xlu0 %831, %v54
    %v833 = vpop.permute.xlu0 %832
    %v835 = vmul.f32 %v732, %v805
    %v836 = vmul.f32 %v742, %v809
    %v837 = vmul.f32 %v752, %v813
    %v838 = vmul.f32 %v762, %v817
    %v839 = vmul.f32 %v772, %v821
    %v840 = vmul.f32 %v782, %v825
    %v841 = vmul.f32 %v792, %v829
    %v842 = vmul.f32 %v802, %v833
    %v843 = vmul.f32 %v586, %v835
    %v844 = vmul.f32 %v589, %v836
    %v845 = vmul.f32 %v592, %v837
    %v846 = vmul.f32 %v595, %v838
    %v847 = vmul.f32 %v598, %v839
    %v848 = vmul.f32 %v601, %v840
    %v849 = vmul.f32 %v604, %v841
    %v850 = vmul.f32 %v607, %v842
    %v851 = vmul.f32 %v627, %v835
    %v852 = vmul.f32 %v630, %v836
    %v853 = vmul.f32 %v633, %v837
    %v854 = vmul.f32 %v636, %v838
    %v855 = vmul.f32 %v639, %v839
    %v856 = vmul.f32 %v642, %v840
    %v857 = vmul.f32 %v645, %v841
    %v858 = vmul.f32 %v648, %v842
    %859 = vset.pattern.permute.xlu0 5
    %860 = vperm.xlu0 %859, %v47
    %v861 = vpop.permute.xlu0 %860
    %863 = vset.pattern.permute.xlu0 5
    %864 = vperm.xlu0 %863, %v48
    %v865 = vpop.permute.xlu0 %864
    %867 = vset.pattern.permute.xlu0 5
    %868 = vperm.xlu0 %867, %v49
    %v869 = vpop.permute.xlu0 %868
    %871 = vset.pattern.permute.xlu0 5
    %872 = vperm.xlu0 %871, %v50
    %v873 = vpop.permute.xlu0 %872
    %875 = vset.pattern.permute.xlu0 5
    %876 = vperm.xlu0 %875, %v51
    %v877 = vpop.permute.xlu0 %876
    %879 = vset.pattern.permute.xlu0 5
    %880 = vperm.xlu0 %879, %v52
    %v881 = vpop.permute.xlu0 %880
    %883 = vset.pattern.permute.xlu0 5
    %884 = vperm.xlu0 %883, %v53
    %v885 = vpop.permute.xlu0 %884
    %887 = vset.pattern.permute.xlu0 5
    %888 = vperm.xlu0 %887, %v54
    %v889 = vpop.permute.xlu0 %888
    %v891 = vsub.f32 %v861, %v851
    %v892 = vsub.f32 %v865, %v852
    %v893 = vsub.f32 %v869, %v853
    %v894 = vsub.f32 %v873, %v854
    %v895 = vsub.f32 %v877, %v855
    %v896 = vsub.f32 %v881, %v856
    %v897 = vsub.f32 %v885, %v857
    %v898 = vsub.f32 %v889, %v858
    %v899 = vadd.f32 %v843, %v891
    %v900 = vadd.f32 %v844, %v892
    %v901 = vadd.f32 %v845, %v893
    %v902 = vadd.f32 %v846, %v894
    %v903 = vadd.f32 %v847, %v895
    %v904 = vadd.f32 %v848, %v896
    %v905 = vadd.f32 %v849, %v897
    %v906 = vadd.f32 %v850, %v898
    %v907 = vmax.f32 %v899, 0.0
    %v908 = vmax.f32 %v900, 0.0
    %v909 = vmax.f32 %v901, 0.0
    %v910 = vmax.f32 %v902, 0.0
    %v911 = vmax.f32 %v903, 0.0
    %v912 = vmax.f32 %v904, 0.0
    %v913 = vmax.f32 %v905, 0.0
    %v914 = vmax.f32 %v906, 0.0
    %v915 = vld [vmem:[#allocation2] sm:$0xff]
    %916 = vset.pattern.permute.xlu0 6
    %917 = vperm.xlu0 %916, %v47
    %v918 = vpop.permute.xlu0 %917
    %v921 = vsel %vm173, %v915, 0
    %923 = vmatpush.msra.mxu0 0.0
    %924 = vmatpush.msra.mxu0 0.0
    %925 = vmatpush.msra.mxu0 0.0
    %926 = vmatpush.msra.mxu0 0.0
    %927 = vmatpush.msra.mxu0 0.0
    %928 = vmatpush.msra.mxu0 0.0
    %929 = vmatpush.msra.mxu0 0.0
    %930 = vmatpush.msra.mxu0 0.0
    %931 = vmatpush.msra.mxu0 %v914
    %932 = vmatpush.msra.mxu0 %v913
    %933 = vmatpush.msra.mxu0 %v912
    %934 = vmatpush.msra.mxu0 %v911
    %935 = vmatpush.msra.mxu0 %v910
    %936 = vmatpush.msra.mxu0 %v909
    %937 = vmatpush.msra.mxu0 %v908
    %938 = vmatpush.msra.mxu0 %v907
    %939 = vmatmul.f32.gmra.mxu0 %v921
    %v940 = vpop.f32.mrf.mxu0
    %v941 = vadd.f32 %v918, %v940
    %942 = vdwg.mxu0
    %v943 = vtanh.pop %v941
    %944 = vset.pattern.permute.xlu0 7
    %945 = vperm.xlu0 %944, %v47
    %v946 = vpop.permute.xlu0 %945
    %v948 = vmul.f32 %v943, %v946
    %949 = vset.pattern.permute.xlu0 8
    %950 = vperm.xlu0 %949, %v47
    %v951 = vpop.permute.xlu0 %950
    %v953 = vmul.f32 %v941, %v951
    %v954 = vadd.f32 %v948, %v953
    %955 = vset.pattern.permute.xlu0 9
    %956 = vperm.xlu0 %955, %v47
    %v957 = vpop.permute.xlu0 %956
    %v959 = vadd.f32 %v954, %v957
    %960 = vst [vmem:[#allocation5] sm:$0xff] %v959
    // Predicated region
    $region30: #{tpu_custom_call.1} parent=1 // pred_check
      _
    $region31: #{tpu_custom_call.1} parent=1 // pred_check_branch
      %962 = sbr.rel (0) target = $region33
    $region32: #{tpu_custom_call.1} parent=1 // pred_region
      %964 = vsyncadd [#allocation4], 0
      %s966 = sshll.u32 [#allocation5], 4
      %s967 = int_to_ptr.vmem [resolvable:$true] %s966
      %s968 = sshll.u32 %s6, 4
      %s969 = int_to_ptr.hbm [resolvable:$true] %s968
      %971 = dma.vmem_to_hbm [thread:$0]  %s967, 128, %s969, [#allocation4]
    $region33: #{tpu_custom_call.1} parent=1 // pred_fallthru
      _
    // Predicated region
    $region34: #{tpu_custom_call.1} parent=1 // pred_check
      _
    $region35: #{tpu_custom_call.1} parent=1 // pred_check_branch
      %973 = sbr.rel (0) target = $region37
    $region36: #{tpu_custom_call.1} parent=1 // pred_region
      %975 = dma.done [#allocation4], 128
    $region37: #{tpu_custom_call.1} parent=1 // pred_fallthru
      _
    %976 = vsyncpa [#allocation3], 1
    %977 = vsyncpa [#allocation4], 1

</llo_original>
